<compile_context>
chip_gen: v6e
topology: v6e:2x2x1
jax: 0.10.0
libtpu: 0.0.40
codegen_flags: <defaults>
</compile_context>

<pallas_src>
import jax
import jax.numpy as jnp
from jax.experimental import pallas as pl
from jax.experimental.pallas import tpu as pltpu


def _newnn_kernel(params_ref, x_ref, o_ref):
    # params_ref: SMEM f32[10] = [w00, b00, w01, b01, w02, b02, w11, w12, w13, w20]
    w00 = params_ref[0]
    b00 = params_ref[1]
    w01 = params_ref[2]
    b01 = params_ref[3]
    w02 = params_ref[4]
    b02 = params_ref[5]
    w11 = params_ref[6]
    w12 = params_ref[7]
    w13 = params_ref[8]
    w20 = params_ref[9]

    x = x_ref[...].astype(jnp.float32)

    # Three ReLU branches on the VPU; tanh goes to the EUP slot (free vs VALU).
    out1 = jnp.maximum(x * w00 + b00, 0.0) * w11
    out2 = jnp.maximum(x * w01 + b01, 0.0) * w12
    out3 = jnp.maximum(x * w02 + b02, 0.0) * w13
    out = jnp.tanh(out1 + out2 + out3) * w20

    o_ref[...] = out.astype(o_ref.dtype)


def _round_up(v, m):
    return ((v + m - 1) // m) * m


def _vmem_capacity_bytes():
    try:
        info = pltpu.get_tpu_info()
        cap = getattr(info, "vmem_capacity_bytes", None)
        if cap:
            return int(cap)
    except Exception:
        pass
    return 64 << 20  # conservative: v7x per-TensorCore VMEM


def _flat_2d_view(x, n_cap=2048):
    """Copy-free 2D view of x that is as lane-dense as possible."""
    e = int(x.size)
    # Preferred: last dim a multiple of 128 that divides the element count.
    top = (min(n_cap, e) // 128) * 128
    for n in range(top, 0, -128):
        if e % n == 0:
            return x.reshape(e // n, n)
    # Fallback: keep the original trailing dim (still a free reshape).
    if x.ndim >= 2:
        return x.reshape(-1, x.shape[-1])
    return x.reshape(1, e)


def newnn_forward(x, params, *, tm=None, tn=None):
    """Elementwise NewNN forward. x: f32[...]; params: f32[10]."""
    orig_shape = x.shape
    if x.size == 0:
        return x

    params = params.astype(jnp.float32)
    x2 = _flat_2d_view(x)
    M, N = x2.shape
    itemsize = x2.dtype.itemsize
    sub = {1: 32, 2: 16, 4: 8}.get(itemsize, 8)  # min sublane multiple per dtype

    # Per-generation default tile (kept lane-dense; multiples of (sub, 128)).
    if tm is None or tn is None:
        big_vmem = _vmem_capacity_bytes() >= (100 << 20)  # v5e/v6e vs v7x
        tm = 1024 if tm is None else tm
        tn = (2048 if big_vmem else 1024) if tn is None else tn
    tm = _round_up(tm, sub)
    tn = _round_up(tn, 128)

    # Block shapes: either (sub,128)-aligned tiles or full-extent dims; ragged
    # boundary blocks are handled by Pallas partial DMAs (no pad, no slice).
    tm_eff = M if M <= tm else tm
    tn_eff = N if N <= tn else tn
    grid_m = pl.cdiv(M, tm_eff)
    grid_n = pl.cdiv(N, tn_eff)

    # If the whole (largish) array fits one block, split rows so both v7x
    # TensorCores get work (harmless elsewhere).
    if grid_m * grid_n == 1 and M >= 2 * sub:
        half = _round_up(pl.cdiv(M, 2), sub)
        if half < M:
            tm_eff = half
            grid_m = pl.cdiv(M, tm_eff)

    # VMEM budget: input + output, double-buffered, with headroom.
    tile_bytes = tm_eff * tn_eff * itemsize
    vmem_cap = _vmem_capacity_bytes()
    vmem_limit = int(min(max(6 * tile_bytes, 16 << 20),
                         max(vmem_cap - (16 << 20), 32 << 20),
                         96 << 20))

    n_elem = M * N
    cost = pl.CostEstimate(
        flops=12 * n_elem,
        transcendentals=n_elem,
        bytes_accessed=2 * n_elem * itemsize,
    )

    out = pl.pallas_call(
        _newnn_kernel,
        out_shape=jax.ShapeDtypeStruct((M, N), x.dtype),
        grid_spec=pl.GridSpec(
            grid=(grid_m, grid_n),
            in_specs=[
                pl.BlockSpec(memory_space=pltpu.MemorySpace.SMEM),    # params f32[10]
                pl.BlockSpec((tm_eff, tn_eff), lambda i, j: (i, j)),  # x tile
            ],
            out_specs=pl.BlockSpec((tm_eff, tn_eff), lambda i, j: (i, j)),
        ),
        compiler_params=pltpu.CompilerParams(
            dimension_semantics=("parallel", "parallel"),
            vmem_limit_bytes=vmem_limit,
        ),
        cost_estimate=cost,
    )(params, x2)

    return out.reshape(orig_shape)


def newnn_reference(x, params):
    w00, b00, w01, b01, w02, b02, w11, w12, w13, w20 = [params[i] for i in range(10)]
    o1 = jax.nn.relu(x * w00 + b00) * w11
    o2 = jax.nn.relu(x * w01 + b01) * w12
    o3 = jax.nn.relu(x * w02 + b02) * w13
    return jnp.tanh(o1 + o2 + o3) * w20


if __name__ == "__main__":
    # Deterministic parameters matching the PyTorch __init__ values.
    params = jnp.array(
        [1.1, -0.85,   # w00, b00
         0.0, -0.5,    # w01, b01
         1.5, 0.21,    # w02, b02
         1.05,         # w11
         -1.7,         # w12
         -0.22,        # w13
         1.85],        # w20
        dtype=jnp.float32)

    key = jax.random.PRNGKey(0)
    k1, k2, k3 = jax.random.split(key, 3)

    # Small 4-D input (elementwise op; shape is representative, not required).
    x1 = jax.random.normal(k1, (2, 4, 16, 16), dtype=jnp.float32)
    out1 = jax.block_until_ready(newnn_forward(x1, params))
    assert out1.shape == x1.shape and out1.dtype == x1.dtype
    assert jnp.allclose(out1, newnn_reference(x1, params), atol=1e-6, rtol=1e-6), \
        "mismatch vs reference (4-D)"

    # Unaligned 2-D shape: exercises the copy-free ragged path (no pad/slice).
    x2 = jax.random.normal(k2, (10, 200), dtype=jnp.float32)
    out2 = jax.block_until_ready(newnn_forward(x2, params))
    assert out2.shape == x2.shape
    assert jnp.allclose(out2, newnn_reference(x2, params), atol=1e-6, rtol=1e-6), \
        "mismatch vs reference (unaligned)"

    # Larger aligned shape: exercises the multi-block grid / megacore split.
    x3 = jax.random.normal(k3, (1024, 256), dtype=jnp.float32)
    out3 = jax.block_until_ready(newnn_forward(x3, params))
    assert jnp.allclose(out3, newnn_reference(x3, params), atol=1e-6, rtol=1e-6), \
        "mismatch vs reference (aligned)"

    print("KERNEL_OK")
</pallas_src>

<mosaic_0001>
module attributes {stable_mosaic.version = 11 : i64} {
  func.func @_newnn_kernel(%arg0: i32, %arg1: i32, %arg2: memref<10xf32, #tpu.memory_space<smem>>, %arg3: memref<1x1024xf32, #tpu.memory_space<vmem>>, %arg4: memref<1x1024xf32, #tpu.memory_space<vmem>>) attributes {dimension_semantics = [#tpu.dimension_semantics<parallel>, #tpu.dimension_semantics<parallel>], iteration_bounds = array<i64: 1, 2>, scalar_prefetch = 0 : i64, scratch_operands = 0 : i64, tpu.core_type = #tpu.core_type<tc>, window_params = [{transform_indices = @transform_0, window_bounds = array<i64: 10>}, {transform_indices = @transform_1, window_bounds = array<i64: 1, 1024>}, {transform_indices = @transform_2, window_bounds = array<i64: 1, 1024>}]} {
    %c0 = arith.constant 0 : index
    %0 = memref.load %arg2[%c0] : memref<10xf32, #tpu.memory_space<smem>>
    %c1 = arith.constant 1 : index
    %1 = memref.load %arg2[%c1] : memref<10xf32, #tpu.memory_space<smem>>
    %c2 = arith.constant 2 : index
    %2 = memref.load %arg2[%c2] : memref<10xf32, #tpu.memory_space<smem>>
    %c3 = arith.constant 3 : index
    %3 = memref.load %arg2[%c3] : memref<10xf32, #tpu.memory_space<smem>>
    %c4 = arith.constant 4 : index
    %4 = memref.load %arg2[%c4] : memref<10xf32, #tpu.memory_space<smem>>
    %c5 = arith.constant 5 : index
    %5 = memref.load %arg2[%c5] : memref<10xf32, #tpu.memory_space<smem>>
    %c6 = arith.constant 6 : index
    %6 = memref.load %arg2[%c6] : memref<10xf32, #tpu.memory_space<smem>>
    %c7 = arith.constant 7 : index
    %7 = memref.load %arg2[%c7] : memref<10xf32, #tpu.memory_space<smem>>
    %c8 = arith.constant 8 : index
    %8 = memref.load %arg2[%c8] : memref<10xf32, #tpu.memory_space<smem>>
    %c9 = arith.constant 9 : index
    %9 = memref.load %arg2[%c9] : memref<10xf32, #tpu.memory_space<smem>>
    %c0_0 = arith.constant 0 : index
    %c0_1 = arith.constant 0 : index
    %10 = vector.load %arg3[%c0_0, %c0_1] : memref<1x1024xf32, #tpu.memory_space<vmem>>, vector<1x1024xf32>
    %11 = vector.broadcast %0 : f32 to vector<1x1024xf32>
    %12 = arith.mulf %10, %11 : vector<1x1024xf32>
    %13 = vector.broadcast %1 : f32 to vector<1x1024xf32>
    %14 = arith.addf %12, %13 : vector<1x1024xf32>
    %cst = arith.constant 0.000000e+00 : f32
    %15 = vector.broadcast %cst : f32 to vector<1x1024xf32>
    %16 = arith.maximumf %14, %15 : vector<1x1024xf32>
    %17 = vector.broadcast %6 : f32 to vector<1x1024xf32>
    %18 = arith.mulf %16, %17 : vector<1x1024xf32>
    %19 = vector.broadcast %2 : f32 to vector<1x1024xf32>
    %20 = arith.mulf %10, %19 : vector<1x1024xf32>
    %21 = vector.broadcast %3 : f32 to vector<1x1024xf32>
    %22 = arith.addf %20, %21 : vector<1x1024xf32>
    %cst_2 = arith.constant 0.000000e+00 : f32
    %23 = vector.broadcast %cst_2 : f32 to vector<1x1024xf32>
    %24 = arith.maximumf %22, %23 : vector<1x1024xf32>
    %25 = vector.broadcast %7 : f32 to vector<1x1024xf32>
    %26 = arith.mulf %24, %25 : vector<1x1024xf32>
    %27 = vector.broadcast %4 : f32 to vector<1x1024xf32>
    %28 = arith.mulf %10, %27 : vector<1x1024xf32>
    %29 = vector.broadcast %5 : f32 to vector<1x1024xf32>
    %30 = arith.addf %28, %29 : vector<1x1024xf32>
    %cst_3 = arith.constant 0.000000e+00 : f32
    %31 = vector.broadcast %cst_3 : f32 to vector<1x1024xf32>
    %32 = arith.maximumf %30, %31 : vector<1x1024xf32>
    %33 = vector.broadcast %8 : f32 to vector<1x1024xf32>
    %34 = arith.mulf %32, %33 : vector<1x1024xf32>
    %35 = arith.addf %18, %26 : vector<1x1024xf32>
    %36 = arith.addf %35, %34 : vector<1x1024xf32>
    %37 = math.tanh %36 : vector<1x1024xf32>
    %38 = vector.broadcast %9 : f32 to vector<1x1024xf32>
    %39 = arith.mulf %37, %38 : vector<1x1024xf32>
    %c0_4 = arith.constant 0 : index
    %c0_5 = arith.constant 0 : index
    %40 = vector.load %arg4[%c0_4, %c0_5] : memref<1x1024xf32, #tpu.memory_space<vmem>>, vector<1x1024xf32>
    tpu.vector_store %arg4[%c0_4, %c0_5], %39 {strides = array<i32>} : memref<1x1024xf32, #tpu.memory_space<vmem>>, vector<1x1024xf32>,
    return
  }
  func.func @transform_0(%arg0: i32, %arg1: i32) -> i32 {
    %c0_i32 = arith.constant 0 : i32
    %c0_i32_0 = arith.constant 0 : i32
    return %c0_i32 : i32
  }
  func.func @transform_1(%arg0: i32, %arg1: i32) -> (i32, i32) {
    %c0_i32 = arith.constant 0 : i32
    return %arg0, %arg1 : i32, i32
  }
  func.func @transform_2(%arg0: i32, %arg1: i32) -> (i32, i32) {
    %c0_i32 = arith.constant 0 : i32
    return %arg0, %arg1 : i32, i32
  }
}

</mosaic_0001>

<llo_original>
// kernel: tpu_custom_call.1
$region0: #{tpu_custom_call.1}
  #allocation0 [shape = 'u32[]', space=smem, size = 0x4, offset = 0x4, fixed_abs, tag = 'smem constant byte address 0x4 - core index']
  #allocation1 [shape = 'u32[144,128]{1,0:T(1,128)}', space=vmem, size = 0x12000, scoped, tag = 'internal scratch']
  %s0 = inlined_call_operand.hbm [shape: f32[10], index: 0, kind: input, shape index: {}]
  %s1 = inlined_call_operand.hbm [shape: f32[1,2048], index: 1, kind: input, shape index: {}]
  %s2 = inlined_call_operand.hbm [shape: f32[1,2048], index: 2, kind: output, shape index: {}]
  %s3 = sld [smem:[#allocation0]]
  $region49: #{tpu_custom_call.1} parent=0
    _
  %s5 = ssub.s32 1, %s3
  %s6 = scalar_select 0, %s5, %s3
  $region1: #{tpu_custom_call.1} parent=0
    #allocation2 [shape = 'u8[512]{0}', space=smem, size = 0x200, scoped, tag = 'input window, operand 0, single buffered']
    #allocation3 [shape = 's32[2]{0}', space=sflag, size = 0x8, scoped, tag = 'scoped memory for tpu_custom_call.1']
    #allocation4 [shape = 's32[2]{0}', space=sflag, size = 0x8, scoped, tag = 'scoped memory for tpu_custom_call.1']
    #allocation5 [shape = 's32[2]{0}', space=sflag, size = 0x8, scoped, tag = 'scoped memory for tpu_custom_call.1']
    #allocation6 [shape = 'u8[8192]{0}', space=vmem, size = 0x2000, scoped, tag = 'input window, operand 1']
    #allocation7 [shape = 'u8[8192]{0}', space=vmem, size = 0x2000, scoped, tag = 'output window, operand 0']
    %7 = vsyncpa [#allocation5], 0
    %8 = vsyncpa [#allocation3], 0
    %s9 = scalar_lea.sflag [#allocation3], 1
    %10 = vsyncpa %s9, 0
    %11 = vsyncpa [#allocation4], 0
    %s12 = scalar_lea.sflag [#allocation4], 1
    %13 = vsyncpa %s12, 0
    loop: start=0, step=1, limit=4
    $region2: #{tpu_custom_call.1} parent=1 // loop_pre_header
      _
    $region3: #{tpu_custom_call.1} parent=1 // loop_header
      %s15 = sphi 0, %s19
      %p16 = scmp.ge.s32.totalorder %s15, 4
      %s22 = sphi 0, %s34
      %s23 = sphi 0, %s30
      %s24 = sphi 0, %s22
      %s25 = sphi 0, %s23
      %s26 = sphi 0, %s24
      %s27 = sphi 0, %s25
      %s35 = sphi 0, %s35
      %s37 = sphi 0, %s35
      %s38 = sphi 0, %s37
      %s52 = sphi 0, %s38
      %s60 = sphi 0, %s62
      %s63 = sphi 0, %s60
      %s64 = sphi 0, %s63
      %s80 = sphi 0, %s64
      %s88 = sphi 0, %s90
      %s91 = sphi 0, %s88
      %s92 = sphi 0, %s91
      %s108 = sphi 0, %s92
    $region4: #{tpu_custom_call.1} parent=1 // loop_header_branch
      %18 = sbr.rel (%p16) target = $region8
    $region5: #{tpu_custom_call.1} parent=1 // loop_body
      %s20 = ssub.s32 %s15, 1
      %s21 = ssub.s32 %s15, 2
      %s28 = sadd.s32 1, %s23
      %p29 = scmp.ge.s32.totalorder %s28, 2
      %s30 = scalar_select %p29, 0, %s28
      %s31 = sadd.s32 1, %s22
      %s32 = scalar_select %p29, %s31, %s22
      %p33 = scmp.ge.s32.totalorder %s32, 1
      %s34 = scalar_select %p33, 0, %s32
      %s36 = sadd.s32 %s35, 1
      %p39 = scmp.eq.s32.totalorder %s15, 1
      %p40 = scmp.ne.s32.totalorder %s35, %s37
      %p41 = scmp.eq.s32.totalorder %s15, 0
      %p42 = por %p40, %p41
      %p43 = scmp.ne.s32.totalorder %s35, %s37
      %p44 = scmp.eq.s32.totalorder %s20, 1
      %p45 = por %p43, %p44
      %p46 = scmp.ne.s32.totalorder %s37, %s38
      %p47 = scmp.eq.s32.totalorder %s20, 0
      %p48 = por %p46, %p47
      %p49 = scmp.ne.s32.totalorder %s37, %s38
      %p50 = scmp.eq.s32.totalorder %s21, 1
      %p51 = por %p49, %p50
      %p53 = scmp.ne.s32.totalorder %s38, %s52
      %p54 = scmp.eq.s32.totalorder %s21, 0
      %p55 = por %p53, %p54
      %s56 = ssub.s32 %s22, %s34
      %s57 = ssub.s32 %s23, %s30
      %s58 = sor.u32 %s56, %s57
      %p59 = scmp.eq.s32.totalorder %s58, 0
      %s61 = sadd.s32 %s60, 1
      %s62 = scalar_select %p59, %s60, %s61
      %p65 = pneg %p59
      %p66 = scmp.eq.s32.totalorder %s15, 1
      %p67 = por %p65, %p66
      %p68 = scmp.ne.s32.totalorder %s60, %s63
      %p69 = scmp.eq.s32.totalorder %s15, 0
      %p70 = por %p68, %p69
      %p71 = scmp.ne.s32.totalorder %s60, %s63
      %p72 = scmp.eq.s32.totalorder %s20, 1
      %p73 = por %p71, %p72
      %p74 = scmp.ne.s32.totalorder %s63, %s64
      %p75 = scmp.eq.s32.totalorder %s20, 0
      %p76 = por %p74, %p75
      %p77 = scmp.ne.s32.totalorder %s63, %s64
      %p78 = scmp.eq.s32.totalorder %s21, 1
      %p79 = por %p77, %p78
      %p81 = scmp.ne.s32.totalorder %s64, %s80
      %p82 = scmp.eq.s32.totalorder %s21, 0
      %p83 = por %p81, %p82
      %s84 = ssub.s32 %s22, %s34
      %s85 = ssub.s32 %s23, %s30
      %s86 = sor.u32 %s84, %s85
      %p87 = scmp.eq.s32.totalorder %s86, 0
      %s89 = sadd.s32 %s88, 1
      %s90 = scalar_select %p87, %s88, %s89
      %p93 = pneg %p87
      %p94 = scmp.eq.s32.totalorder %s15, 1
      %p95 = por %p93, %p94
      %p96 = scmp.ne.s32.totalorder %s88, %s91
      %p97 = scmp.eq.s32.totalorder %s15, 0
      %p98 = por %p96, %p97
      %p99 = scmp.ne.s32.totalorder %s88, %s91
      %p100 = scmp.eq.s32.totalorder %s20, 1
      %p101 = por %p99, %p100
      %p102 = scmp.ne.s32.totalorder %s91, %s92
      %p103 = scmp.eq.s32.totalorder %s20, 0
      %p104 = por %p102, %p103
      %p105 = scmp.ne.s32.totalorder %s91, %s92
      %p106 = scmp.eq.s32.totalorder %s21, 1
      %p107 = por %p105, %p106
      %p109 = scmp.ne.s32.totalorder %s92, %s108
      %p110 = scmp.eq.s32.totalorder %s21, 0
      %p111 = por %p109, %p110
      %p112 = scmp.le.s32.totalorder 1, %s15
      %p113 = scmp.lt.s32.totalorder %s15, 3
      %p114 = pnand %p112, %p113
      %p115 = pneg %p114
      // Predicated region
      $region9: #{tpu_custom_call.1} parent=5 // pred_check
        _
      $region10: #{tpu_custom_call.1} parent=5 // pred_check_branch
        %117 = sbr.rel (%p114) target = $region12
      $region11: #{tpu_custom_call.1} parent=5 // pred_region
        %s118 = ssub.s32 %s15, 1
        // Predicated region
        $region13: #{tpu_custom_call.1} parent=11 // pred_check
          %p119 = pneg %p48
        $region14: #{tpu_custom_call.1} parent=11 // pred_check_branch
          %121 = sbr.rel (%p119) target = $region16
        $region15: #{tpu_custom_call.1} parent=11 // pred_region
          %s123 = ssub.s32 16, 16
          %124 = vsyncadd [#allocation5], %s123
          %127 = dma.hbm_to_smem %s0, 16, [#allocation2], [#allocation5]
        $region16: #{tpu_custom_call.1} parent=11 // pred_fallthru
          _
      $region12: #{tpu_custom_call.1} parent=5 // pred_fallthru
        _
      %p128 = scmp.lt.s32.totalorder %s15, 2
      // Predicated region
      $region17: #{tpu_custom_call.1} parent=5 // pred_check
        %p129 = pneg %p128
      $region18: #{tpu_custom_call.1} parent=5 // pred_check_branch
        %131 = sbr.rel (%p129) target = $region20
      $region19: #{tpu_custom_call.1} parent=5 // pred_region
        // Predicated region
        $region21: #{tpu_custom_call.1} parent=19 // pred_check
          %p132 = pneg %p70
        $region22: #{tpu_custom_call.1} parent=19 // pred_check_branch
          %134 = sbr.rel (%p132) target = $region24
        $region23: #{tpu_custom_call.1} parent=19 // pred_region
          %s135 = sand.u32 %s60, 1
          %s136 = scalar_lea.sflag [#allocation3], %s135
          %s137 = sand.u32 %s60, 1
          %s138 = smul.addr %s137, 8
          %s139 = scalar_lea.vmem [#allocation6], %s138
          %s140 = smul.u32 8, %s23
          %s142 = ssub.s32 128, 128
          %143 = vsyncadd %s136, %s142
          %s144 = smul.addr %s22, 16
          %s145 = sadd.s32 %s140, %s144
          %s146 = smul.addr %s145, 16
          %s147 = scalar_lea.hbm %s1, %s146
          %s149 = sshll.u32 %s139, 4
          %s150 = int_to_ptr.vmem [resolvable:$true] %s149
          %152 = dma.hbm_to_vmem [thread:$0]  %s147, 128, %s150, %s136
        $region24: #{tpu_custom_call.1} parent=19 // pred_fallthru
          _
      $region20: #{tpu_custom_call.1} parent=5 // pred_fallthru
        _
      %p153 = scmp.le.s32.totalorder 1, %s15
      %p154 = scmp.lt.s32.totalorder %s15, 3
      %p155 = pnand %p153, %p154
      %p156 = pneg %p155
      // Predicated region
      $region25: #{tpu_custom_call.1} parent=5 // pred_check
        _
      $region26: #{tpu_custom_call.1} parent=5 // pred_check_branch
        %158 = sbr.rel (%p155) target = $region28
      $region27: #{tpu_custom_call.1} parent=5 // pred_region
        %s159 = ssub.s32 %s15, 1
        // Predicated region
        $region29: #{tpu_custom_call.1} parent=27 // pred_check
          %p160 = pneg %p48
        $region30: #{tpu_custom_call.1} parent=27 // pred_check_branch
          %162 = sbr.rel (%p160) target = $region32
        $region31: #{tpu_custom_call.1} parent=27 // pred_region
          %163 = dma.done [#allocation5], 16
        $region32: #{tpu_custom_call.1} parent=27 // pred_fallthru
          _
        %s164 = sand.u32 %s63, 1
        %s165 = scalar_lea.sflag [#allocation3], %s164
        %s166 = sand.u32 %s63, 1
        %s167 = smul.addr %s166, 8
        %s168 = scalar_lea.vmem [#allocation6], %s167
        // Predicated region
        $region33: #{tpu_custom_call.1} parent=27 // pred_check
          %p169 = pneg %p76
        $region34: #{tpu_custom_call.1} parent=27 // pred_check_branch
          %171 = sbr.rel (%p169) target = $region36
        $region35: #{tpu_custom_call.1} parent=27 // pred_region
          %172 = dma.done %s165, 128
        $region36: #{tpu_custom_call.1} parent=27 // pred_fallthru
          _
        %173 = sfence
        %p174 = pneg %p48
        %p175 = pneg %p45
        %s176 = sand.u32 %s63, 1
        %s177 = scalar_lea.sflag [#allocation3], %s176
        %s178 = sand.u32 %s63, 1
        %s179 = smul.addr %s178, 8
        %s180 = scalar_lea.vmem [#allocation6], %s179
        %p181 = pneg %p76
        %p182 = pneg %p73
        %p183 = pneg %p104
        %p184 = pneg %p101
        %s185 = sand.u32 %s91, 1
        %s186 = scalar_lea.sflag [#allocation4], %s185
        %s187 = sand.u32 %s91, 1
        %s188 = smul.addr %s187, 8
        %s189 = scalar_lea.vmem [#allocation7], %s188
        %s190 = smul.u32 8, %s25
        %s191 = smul.u32 8, %s25
        %s192 = sld [smem:[#allocation2]]
        %s193 = sld [smem:[#allocation2 + $0x1]]
        %s194 = sld [smem:[#allocation2 + $0x2]]
        %s195 = sld [smem:[#allocation2 + $0x3]]
        %s196 = sld [smem:[#allocation2 + $0x4]]
        %s197 = sld [smem:[#allocation2 + $0x5]]
        %s198 = sld [smem:[#allocation2 + $0x6]]
        %s199 = sld [smem:[#allocation2 + $0x7]]
        %s200 = sld [smem:[#allocation2 + $0x8]]
        %s201 = sld [smem:[#allocation2 + $0x9]]
        %v202 = vld [vmem:[%s168] sm:$0xff]
        %v203 = vstv %s192
        %v204 = vmul.f32 %v202, %v203
        %v205 = vstv %s193
        %v206 = vadd.f32 %v204, %v205
        %v207 = vmax.f32 %v206, 0.0
        %v208 = vstv %s198
        %v209 = vmul.f32 %v207, %v208
        %v210 = vstv %s194
        %v211 = vmul.f32 %v202, %v210
        %v212 = vstv %s195
        %v213 = vadd.f32 %v211, %v212
        %v214 = vmax.f32 %v213, 0.0
        %v215 = vstv %s199
        %v216 = vmul.f32 %v214, %v215
        %v217 = vstv %s196
        %v218 = vmul.f32 %v202, %v217
        %v219 = vstv %s197
        %v220 = vadd.f32 %v218, %v219
        %v221 = vmax.f32 %v220, 0.0
        %v222 = vstv %s200
        %v223 = vmul.f32 %v221, %v222
        %v224 = vadd.f32 %v209, %v216
        %v225 = vadd.f32 %v224, %v223
        %v226 = vtanh.pop %v225
        %v227 = vstv %s201
        %v228 = vmul.f32 %v226, %v227
        %229 = vst [vmem:[%s189] sm:$0xff] %v228
        %s230 = sand.u32 %s91, 1
        %s231 = scalar_lea.sflag [#allocation4], %s230
        %s232 = sand.u32 %s91, 1
        %s233 = smul.addr %s232, 8
        %s234 = scalar_lea.vmem [#allocation7], %s233
        // Predicated region
        $region37: #{tpu_custom_call.1} parent=27 // pred_check
          %p235 = pneg %p101
        $region38: #{tpu_custom_call.1} parent=27 // pred_check_branch
          %237 = sbr.rel (%p235) target = $region40
        $region39: #{tpu_custom_call.1} parent=27 // pred_region
          %s238 = smul.u32 8, %s25
          %s240 = ssub.s32 128, 128
          %241 = vsyncadd %s231, %s240
          %s242 = smul.addr %s24, 16
          %s243 = sadd.s32 %s238, %s242
          %s244 = smul.addr %s243, 16
          %s245 = scalar_lea.hbm %s2, %s244
          %s247 = sshll.u32 %s234, 4
          %s248 = int_to_ptr.vmem [resolvable:$true] %s247
          %250 = dma.vmem_to_hbm [thread:$0]  %s248, 128, %s245, %s231
        $region40: #{tpu_custom_call.1} parent=27 // pred_fallthru
          _
      $region28: #{tpu_custom_call.1} parent=5 // pred_fallthru
        _
      %p251 = scmp.le.s32.totalorder 2, %s15
      // Predicated region
      $region41: #{tpu_custom_call.1} parent=5 // pred_check
        %p252 = pneg %p251
      $region42: #{tpu_custom_call.1} parent=5 // pred_check_branch
        %254 = sbr.rel (%p252) target = $region44
      $region43: #{tpu_custom_call.1} parent=5 // pred_region
        %s255 = ssub.s32 %s15, 2
        // Predicated region
        $region45: #{tpu_custom_call.1} parent=43 // pred_check
          %p256 = pneg %p107
        $region46: #{tpu_custom_call.1} parent=43 // pred_check_branch
          %258 = sbr.rel (%p256) target = $region48
        $region47: #{tpu_custom_call.1} parent=43 // pred_region
          %s259 = sand.u32 %s92, 1
          %s260 = scalar_lea.sflag [#allocation4], %s259
          %s261 = sand.u32 %s92, 1
          %s262 = smul.addr %s261, 8
          %s263 = scalar_lea.vmem [#allocation7], %s262
          %264 = dma.done %s260, 128
        $region48: #{tpu_custom_call.1} parent=43 // pred_fallthru
          _
      $region44: #{tpu_custom_call.1} parent=5 // pred_fallthru
        _
    $region6: #{tpu_custom_call.1} parent=1 // loop_footer
      %s19 = sadd.s32 1, %s15
    $region7: #{tpu_custom_call.1} parent=1 // loop_footer_branch
      %14 = sbr.rel target = $region3
    $region8: #{tpu_custom_call.1} parent=1 // loop_exit
      _
    %265 = vsyncpa [#allocation3], 1
    %s266 = scalar_lea.sflag [#allocation3], 1
    %267 = vsyncpa %s266, 1
    %268 = vsyncpa [#allocation4], 1
    %s269 = scalar_lea.sflag [#allocation4], 1
    %270 = vsyncpa %s269, 1
    %271 = vsyncpa [#allocation5], 1
    %s272 = scalar_lea.sflag [#allocation5], 1
    %273 = vsyncpa %s272, 1

</llo_original>
